<compile_context>
chip_gen: v5e
topology: v5e:2x2
jax: 0.10.0
libtpu: 0.0.40
codegen_flags: <defaults>
</compile_context>

<pallas_src>
import math

import jax
import jax.numpy as jnp
from jax.experimental import pallas as pl
from jax.experimental.pallas import tpu as pltpu

NEG_SLOPE = 0.2
INV_SQRT2 = 1.0 / math.sqrt(2.0)


def _leaky_relu(x):
    # LeakyReLU(0.2) on the VPU.
    return jnp.where(x > 0, x, NEG_SLOPE * x)


def resblk_kernel_learned_sc(x_ref, w1_ref, b1_ref, w2_ref, b2_ref, wsc_ref, o_ref):
    x = x_ref[...].astype(jnp.float32)
    # Residual branch: actv -> fc1 -> actv -> fc2   (two MXU passes)
    h = _leaky_relu(x)
    h = jnp.dot(h, w1_ref[...], preferred_element_type=jnp.float32) + b1_ref[...]
    h = _leaky_relu(h)
    h = jnp.dot(h, w2_ref[...], preferred_element_type=jnp.float32) + b2_ref[...]
    # Learned shortcut (no bias)
    sc = jnp.dot(x, wsc_ref[...], preferred_element_type=jnp.float32)
    o_ref[...] = ((sc + h) * INV_SQRT2).astype(o_ref.dtype)


def resblk_kernel_identity_sc(x_ref, w1_ref, b1_ref, w2_ref, b2_ref, o_ref):
    x = x_ref[...].astype(jnp.float32)
    h = _leaky_relu(x)
    h = jnp.dot(h, w1_ref[...], preferred_element_type=jnp.float32) + b1_ref[...]
    h = _leaky_relu(h)
    h = jnp.dot(h, w2_ref[...], preferred_element_type=jnp.float32) + b2_ref[...]
    o_ref[...] = ((x + h) * INV_SQRT2).astype(o_ref.dtype)


def resblk(x, w1_t, b1, w2_t, b2, wsc_t=None, *, tile_b=128):
    """Fused ResBlk forward.

    x     : [B, Din]
    w1_t  : [Din, Din]   (conv1.weight.T), b1: [Din]
    w2_t  : [Din, Dout]  (conv2.weight.T), b2: [Dout]
    wsc_t : [Din, Dout]  (conv1x1.weight.T) or None when dim_in == dim_out
    """
    B, Din = x.shape
    Dout = w2_t.shape[1]
    learned_sc = wsc_t is not None

    tb = min(tile_b, B)
    assert B % tb == 0, "batch must be divisible by the batch tile"
    grid = (B // tb,)

    b1r = b1.reshape(1, Din)
    b2r = b2.reshape(1, Dout)

    in_specs = [
        pl.BlockSpec((tb, Din), lambda i: (i, 0)),        # x  (tiled over batch)
        pl.BlockSpec((Din, Din), lambda i: (0, 0)),       # W1^T (resident)
        pl.BlockSpec((1, Din), lambda i: (0, 0)),         # b1
        pl.BlockSpec((Din, Dout), lambda i: (0, 0)),      # W2^T (resident)
        pl.BlockSpec((1, Dout), lambda i: (0, 0)),        # b2
    ]
    args = [x, w1_t, b1r, w2_t, b2r]
    if learned_sc:
        in_specs.append(pl.BlockSpec((Din, Dout), lambda i: (0, 0)))  # Wsc^T
        args.append(wsc_t)
        kernel = resblk_kernel_learned_sc
    else:
        kernel = resblk_kernel_identity_sc

    return pl.pallas_call(
        kernel,
        out_shape=jax.ShapeDtypeStruct((B, Dout), x.dtype),
        grid_spec=pltpu.PrefetchScalarGridSpec(
            num_scalar_prefetch=0,
            grid=grid,
            in_specs=in_specs,
            out_specs=pl.BlockSpec((tb, Dout), lambda i: (i, 0)),
        ),
        compiler_params=pltpu.CompilerParams(
            dimension_semantics=("parallel",),   # shards batch tiles across TCs on v7x
        ),
    )(*args)


if __name__ == "__main__":
    # Small-but-lane-dense shapes consistent with the module's forward:
    # x is [batch, dim_in]; dims are multiples of 128 to avoid masked stores.
    B = 128          # batch
    Din = 128        # dim_in
    Dout = 256       # dim_out  (!= dim_in -> learned shortcut, like the module)

    key = jax.random.PRNGKey(0)
    kx, k1w, k1b, k2w, k2b, ksc = jax.random.split(key, 6)

    # nn.Linear-style init: uniform(+-1/sqrt(in_features)), torch layout [out, in].
    bnd1 = 1.0 / math.sqrt(Din)
    w1 = jax.random.uniform(k1w, (Din, Din), jnp.float32, -bnd1, bnd1)
    b1 = jax.random.uniform(k1b, (Din,), jnp.float32, -bnd1, bnd1)
    w2 = jax.random.uniform(k2w, (Dout, Din), jnp.float32, -bnd1, bnd1)
    b2 = jax.random.uniform(k2b, (Dout,), jnp.float32, -bnd1, bnd1)
    wsc = jax.random.uniform(ksc, (Dout, Din), jnp.float32, -bnd1, bnd1)  # no bias

    x = jax.random.normal(kx, (B, Din), jnp.float32)

    out = resblk(x, w1.T, b1, w2.T, b2, wsc.T, tile_b=64)
    out = jax.block_until_ready(out)

    # Pure-JAX reference.
    def leaky(v):
        return jnp.where(v > 0, v, NEG_SLOPE * v)

    h = leaky(x)
    h = h @ w1.T + b1
    h = leaky(h)
    h = h @ w2.T + b2
    sc = x @ wsc.T
    ref = (sc + h) * INV_SQRT2
    assert jnp.allclose(out, ref, atol=1e-5, rtol=1e-5), "mismatch vs reference"

    # Also exercise the identity-shortcut path (dim_in == dim_out).
    out_id = resblk(x, w1.T, b1, w1.T, b1, None, tile_b=64)
    out_id = jax.block_until_ready(out_id)
    h = leaky(x)
    h = h @ w1.T + b1
    h = leaky(h)
    h = h @ w1.T + b1
    ref_id = (x + h) * INV_SQRT2
    assert jnp.allclose(out_id, ref_id, atol=1e-5, rtol=1e-5), "identity-sc mismatch"

    print("KERNEL_OK")
</pallas_src>

<mosaic_0001>
module attributes {stable_mosaic.version = 11 : i64} {
  func.func @resblk_kernel_learned_sc(%arg0: i32, %arg1: memref<64x128xf32, #tpu.memory_space<vmem>>, %arg2: memref<128x128xf32, #tpu.memory_space<vmem>>, %arg3: memref<1x128xf32, #tpu.memory_space<vmem>>, %arg4: memref<128x256xf32, #tpu.memory_space<vmem>>, %arg5: memref<1x256xf32, #tpu.memory_space<vmem>>, %arg6: memref<128x256xf32, #tpu.memory_space<vmem>>, %arg7: memref<64x256xf32, #tpu.memory_space<vmem>>) attributes {dimension_semantics = [#tpu.dimension_semantics<parallel>], iteration_bounds = array<i64: 2>, scalar_prefetch = 0 : i64, scratch_operands = 0 : i64, tpu.core_type = #tpu.core_type<tc>, window_params = [{transform_indices = @transform_0, window_bounds = array<i64: 64, 128>}, {pipeline_mode = #tpu.pipeline_mode<synchronous>, transform_indices = @transform_1, window_bounds = array<i64: 128, 128>}, {pipeline_mode = #tpu.pipeline_mode<synchronous>, transform_indices = @transform_2, window_bounds = array<i64: 1, 128>}, {pipeline_mode = #tpu.pipeline_mode<synchronous>, transform_indices = @transform_3, window_bounds = array<i64: 128, 256>}, {pipeline_mode = #tpu.pipeline_mode<synchronous>, transform_indices = @transform_4, window_bounds = array<i64: 1, 256>}, {pipeline_mode = #tpu.pipeline_mode<synchronous>, transform_indices = @transform_5, window_bounds = array<i64: 128, 256>}, {transform_indices = @transform_6, window_bounds = array<i64: 64, 256>}]} {
    %c0 = arith.constant 0 : index
    %c0_0 = arith.constant 0 : index
    %0 = vector.load %arg1[%c0, %c0_0] : memref<64x128xf32, #tpu.memory_space<vmem>>, vector<64x128xf32>
    %cst = arith.constant 0.000000e+00 : f32
    %1 = vector.broadcast %cst : f32 to vector<64x128xf32>
    %2 = arith.cmpf ogt, %0, %1 : vector<64x128xf32>
    %cst_1 = arith.constant 2.000000e-01 : f32
    %3 = vector.broadcast %cst_1 : f32 to vector<64x128xf32>
    %4 = arith.mulf %3, %0 : vector<64x128xf32>
    %5 = arith.select %2, %0, %4 : vector<64x128xi1>, vector<64x128xf32>
    %c0_2 = arith.constant 0 : index
    %c0_3 = arith.constant 0 : index
    %6 = vector.load %arg2[%c0_2, %c0_3] : memref<128x128xf32, #tpu.memory_space<vmem>>, vector<128x128xf32>
    %cst_4 = arith.constant dense<0.000000e+00> : vector<64x128xf32>
    %7 = tpu.matmul %5, %6, %cst_4 {dimension_numbers = #tpu.dot_dimension_numbers<[1], [0], [0], [1], [0, 0, 1, 1], [], []>} : vector<64x128xf32>, vector<128x128xf32>, vector<64x128xf32> -> vector<64x128xf32>
    %c0_5 = arith.constant 0 : index
    %c0_6 = arith.constant 0 : index
    %8 = vector.load %arg3[%c0_5, %c0_6] : memref<1x128xf32, #tpu.memory_space<vmem>>, vector<1x128xf32>
    %9 = vector.broadcast %8 : vector<1x128xf32> to vector<64x128xf32>
    %10 = arith.addf %7, %9 : vector<64x128xf32>
    %cst_7 = arith.constant 0.000000e+00 : f32
    %11 = vector.broadcast %cst_7 : f32 to vector<64x128xf32>
    %12 = arith.cmpf ogt, %10, %11 : vector<64x128xf32>
    %cst_8 = arith.constant 2.000000e-01 : f32
    %13 = vector.broadcast %cst_8 : f32 to vector<64x128xf32>
    %14 = arith.mulf %13, %10 : vector<64x128xf32>
    %15 = arith.select %12, %10, %14 : vector<64x128xi1>, vector<64x128xf32>
    %c0_9 = arith.constant 0 : index
    %c0_10 = arith.constant 0 : index
    %16 = vector.load %arg4[%c0_9, %c0_10] : memref<128x256xf32, #tpu.memory_space<vmem>>, vector<128x256xf32>
    %cst_11 = arith.constant dense<0.000000e+00> : vector<64x256xf32>
    %17 = tpu.matmul %15, %16, %cst_11 {dimension_numbers = #tpu.dot_dimension_numbers<[1], [0], [0], [1], [0, 0, 1, 1], [], []>} : vector<64x128xf32>, vector<128x256xf32>, vector<64x256xf32> -> vector<64x256xf32>
    %c0_12 = arith.constant 0 : index
    %c0_13 = arith.constant 0 : index
    %18 = vector.load %arg5[%c0_12, %c0_13] : memref<1x256xf32, #tpu.memory_space<vmem>>, vector<1x256xf32>
    %19 = vector.broadcast %18 : vector<1x256xf32> to vector<64x256xf32>
    %20 = arith.addf %17, %19 : vector<64x256xf32>
    %c0_14 = arith.constant 0 : index
    %c0_15 = arith.constant 0 : index
    %21 = vector.load %arg6[%c0_14, %c0_15] : memref<128x256xf32, #tpu.memory_space<vmem>>, vector<128x256xf32>
    %cst_16 = arith.constant dense<0.000000e+00> : vector<64x256xf32>
    %22 = tpu.matmul %0, %21, %cst_16 {dimension_numbers = #tpu.dot_dimension_numbers<[1], [0], [0], [1], [0, 0, 1, 1], [], []>} : vector<64x128xf32>, vector<128x256xf32>, vector<64x256xf32> -> vector<64x256xf32>
    %23 = arith.addf %22, %20 : vector<64x256xf32>
    %cst_17 = arith.constant 0.707106769 : f32
    %24 = vector.broadcast %cst_17 : f32 to vector<64x256xf32>
    %25 = arith.mulf %23, %24 : vector<64x256xf32>
    %c0_18 = arith.constant 0 : index
    %c0_19 = arith.constant 0 : index
    %26 = vector.load %arg7[%c0_18, %c0_19] : memref<64x256xf32, #tpu.memory_space<vmem>>, vector<64x256xf32>
    tpu.vector_store %arg7[%c0_18, %c0_19], %25 {strides = array<i32>} : memref<64x256xf32, #tpu.memory_space<vmem>>, vector<64x256xf32>,
    return
  }
  func.func @transform_0(%arg0: i32) -> (i32, i32) {
    %c0_i32 = arith.constant 0 : i32
    %c0_i32_0 = arith.constant 0 : i32
    return %arg0, %c0_i32 : i32, i32
  }
  func.func @transform_1(%arg0: i32) -> (i32, i32) {
    %c0_i32 = arith.constant 0 : i32
    %c0_i32_0 = arith.constant 0 : i32
    %c0_i32_1 = arith.constant 0 : i32
    return %c0_i32, %c0_i32_0 : i32, i32
  }
  func.func @transform_2(%arg0: i32) -> (i32, i32) {
    %c0_i32 = arith.constant 0 : i32
    %c0_i32_0 = arith.constant 0 : i32
    %c0_i32_1 = arith.constant 0 : i32
    return %c0_i32, %c0_i32_0 : i32, i32
  }
  func.func @transform_3(%arg0: i32) -> (i32, i32) {
    %c0_i32 = arith.constant 0 : i32
    %c0_i32_0 = arith.constant 0 : i32
    %c0_i32_1 = arith.constant 0 : i32
    return %c0_i32, %c0_i32_0 : i32, i32
  }
  func.func @transform_4(%arg0: i32) -> (i32, i32) {
    %c0_i32 = arith.constant 0 : i32
    %c0_i32_0 = arith.constant 0 : i32
    %c0_i32_1 = arith.constant 0 : i32
    return %c0_i32, %c0_i32_0 : i32, i32
  }
  func.func @transform_5(%arg0: i32) -> (i32, i32) {
    %c0_i32 = arith.constant 0 : i32
    %c0_i32_0 = arith.constant 0 : i32
    %c0_i32_1 = arith.constant 0 : i32
    return %c0_i32, %c0_i32_0 : i32, i32
  }
  func.func @transform_6(%arg0: i32) -> (i32, i32) {
    %c0_i32 = arith.constant 0 : i32
    %c0_i32_0 = arith.constant 0 : i32
    return %arg0, %c0_i32 : i32, i32
  }
}

</mosaic_0001>

<llo_original>
// kernel: tpu_custom_call.1
$region0: #{tpu_custom_call.1}
  #allocation0 [shape = 'u32[]', space=smem, size = 0x4, offset = 0x4, fixed_abs, tag = 'smem constant byte address 0x4 - core index']
  #allocation1 [shape = 'u32[72,128]{1,0:T(1,128)}', space=vmem, size = 0x9000, scoped, tag = 'internal scratch']
  %s0 = inlined_call_operand.hbm [shape: f32[128,128], index: 0, kind: input, shape index: {}]
  %s1 = inlined_call_operand.hbm [shape: f32[128,128], index: 1, kind: input, shape index: {}]
  %s2 = inlined_call_operand.vmem [shape: f32[1,128], index: 2, kind: input, shape index: {}]
  %s3 = inlined_call_operand.hbm [shape: f32[128,256], index: 3, kind: input, shape index: {}]
  %s4 = inlined_call_operand.vmem [shape: f32[1,256], index: 4, kind: input, shape index: {}]
  %s5 = inlined_call_operand.hbm [shape: f32[128,256], index: 5, kind: input, shape index: {}]
  %s6 = inlined_call_operand.hbm [shape: f32[128,256], index: 6, kind: output, shape index: {}]
  %s7 = sld [smem:[#allocation0]]
  $region73: #{tpu_custom_call.1} parent=0
    _
  %s9 = ssub.s32 1, %s7
  %s10 = scalar_select 0, %s9, %s7
  $region1: #{tpu_custom_call.1} parent=0
    #allocation2 [shape = 'u8[65536]{0}', space=vmem, size = 0x10000, scoped, tag = 'input window, operand 0']
    #allocation3 [shape = 's32[2]{0}', space=sflag, size = 0x8, scoped, tag = 'scoped memory for tpu_custom_call.1']
    #allocation4 [shape = 's32[2]{0}', space=sflag, size = 0x8, scoped, tag = 'scoped memory for tpu_custom_call.1']
    #allocation5 [shape = 'u8[65536]{0}', space=vmem, size = 0x10000, scoped, tag = 'input window, operand 1, single buffered']
    #allocation6 [shape = 's32[1]{0}', space=sflag, size = 0x4, scoped, tag = 'scoped memory for tpu_custom_call.1']
    #allocation7 [shape = 'u8[131072]{0}', space=vmem, size = 0x20000, scoped, tag = 'input window, operand 3, single buffered']
    #allocation8 [shape = 'u8[131072]{0}', space=vmem, size = 0x20000, scoped, tag = 'input window, operand 5, single buffered']
    #allocation9 [shape = 's32[1]{0}', space=sflag, size = 0x4, scoped, tag = 'scoped memory for tpu_custom_call.1']
    #allocation10 [shape = 'u8[131072]{0}', space=vmem, size = 0x20000, scoped, tag = 'output window, operand 0']
    %11 = vsyncpa [#allocation3], 0
    %s12 = scalar_lea.sflag [#allocation3], 1
    %13 = vsyncpa %s12, 0
    %14 = vsyncpa [#allocation6], 0
    %15 = vsyncpa [#allocation9], 0
    %16 = vsyncpa [#allocation4], 0
    %s17 = scalar_lea.sflag [#allocation4], 1
    %18 = vsyncpa %s17, 0
    loop: start=0, step=1, limit=4
    $region2: #{tpu_custom_call.1} parent=1 // loop_pre_header
      _
    $region3: #{tpu_custom_call.1} parent=1 // loop_header
      %s20 = sphi 0, %s24
      %p21 = scmp.ge.s32.totalorder %s20, 4
      %s30 = sphi 0, %s32
      %s33 = sphi 0, %s30
      %s34 = sphi 0, %s33
      %s50 = sphi 0, %s34
      %s54 = sphi 0, %s54
      %s56 = sphi 0, %s54
      %s57 = sphi 0, %s56
      %s71 = sphi 0, %s57
      %s75 = sphi 0, %s75
      %s77 = sphi 0, %s75
      %s78 = sphi 0, %s77
      %s92 = sphi 0, %s78
      %s96 = sphi 0, %s96
      %s98 = sphi 0, %s96
      %s99 = sphi 0, %s98
      %s113 = sphi 0, %s99
      %s117 = sphi 0, %s117
      %s119 = sphi 0, %s117
      %s120 = sphi 0, %s119
      %s134 = sphi 0, %s120
      %s138 = sphi 0, %s138
      %s140 = sphi 0, %s138
      %s141 = sphi 0, %s140
      %s155 = sphi 0, %s141
      %s161 = sphi 0, %s163
      %s164 = sphi 0, %s161
      %s165 = sphi 0, %s164
      %s181 = sphi 0, %s165
    $region4: #{tpu_custom_call.1} parent=1 // loop_header_branch
      %23 = sbr.rel (%p21) target = $region8
    $region5: #{tpu_custom_call.1} parent=1 // loop_body
      %s25 = ssub.s32 %s20, 1
      %s26 = ssub.s32 %s20, 2
      %s27 = sadd.s32 %s20, 1
      %s28 = ssub.s32 %s20, %s27
      %p29 = scmp.eq.s32.totalorder %s28, 0
      %s31 = sadd.s32 %s30, 1
      %s32 = scalar_select %p29, %s30, %s31
      %p35 = pneg %p29
      %p36 = scmp.eq.s32.totalorder %s20, 1
      %p37 = por %p35, %p36
      %p38 = scmp.ne.s32.totalorder %s30, %s33
      %p39 = scmp.eq.s32.totalorder %s20, 0
      %p40 = por %p38, %p39
      %p41 = scmp.ne.s32.totalorder %s30, %s33
      %p42 = scmp.eq.s32.totalorder %s25, 1
      %p43 = por %p41, %p42
      %p44 = scmp.ne.s32.totalorder %s33, %s34
      %p45 = scmp.eq.s32.totalorder %s25, 0
      %p46 = por %p44, %p45
      %p47 = scmp.ne.s32.totalorder %s33, %s34
      %p48 = scmp.eq.s32.totalorder %s26, 1
      %p49 = por %p47, %p48
      %p51 = scmp.ne.s32.totalorder %s34, %s50
      %p52 = scmp.eq.s32.totalorder %s26, 0
      %p53 = por %p51, %p52
      %s55 = sadd.s32 %s54, 1
      %p58 = scmp.eq.s32.totalorder %s20, 1
      %p59 = scmp.ne.s32.totalorder %s54, %s56
      %p60 = scmp.eq.s32.totalorder %s20, 0
      %p61 = por %p59, %p60
      %p62 = scmp.ne.s32.totalorder %s54, %s56
      %p63 = scmp.eq.s32.totalorder %s25, 1
      %p64 = por %p62, %p63
      %p65 = scmp.ne.s32.totalorder %s56, %s57
      %p66 = scmp.eq.s32.totalorder %s25, 0
      %p67 = por %p65, %p66
      %p68 = scmp.ne.s32.totalorder %s56, %s57
      %p69 = scmp.eq.s32.totalorder %s26, 1
      %p70 = por %p68, %p69
      %p72 = scmp.ne.s32.totalorder %s57, %s71
      %p73 = scmp.eq.s32.totalorder %s26, 0
      %p74 = por %p72, %p73
      %s76 = sadd.s32 %s75, 1
      %p79 = scmp.eq.s32.totalorder %s20, 1
      %p80 = scmp.ne.s32.totalorder %s75, %s77
      %p81 = scmp.eq.s32.totalorder %s20, 0
      %p82 = por %p80, %p81
      %p83 = scmp.ne.s32.totalorder %s75, %s77
      %p84 = scmp.eq.s32.totalorder %s25, 1
      %p85 = por %p83, %p84
      %p86 = scmp.ne.s32.totalorder %s77, %s78
      %p87 = scmp.eq.s32.totalorder %s25, 0
      %p88 = por %p86, %p87
      %p89 = scmp.ne.s32.totalorder %s77, %s78
      %p90 = scmp.eq.s32.totalorder %s26, 1
      %p91 = por %p89, %p90
      %p93 = scmp.ne.s32.totalorder %s78, %s92
      %p94 = scmp.eq.s32.totalorder %s26, 0
      %p95 = por %p93, %p94
      %s97 = sadd.s32 %s96, 1
      %p100 = scmp.eq.s32.totalorder %s20, 1
      %p101 = scmp.ne.s32.totalorder %s96, %s98
      %p102 = scmp.eq.s32.totalorder %s20, 0
      %p103 = por %p101, %p102
      %p104 = scmp.ne.s32.totalorder %s96, %s98
      %p105 = scmp.eq.s32.totalorder %s25, 1
      %p106 = por %p104, %p105
      %p107 = scmp.ne.s32.totalorder %s98, %s99
      %p108 = scmp.eq.s32.totalorder %s25, 0
      %p109 = por %p107, %p108
      %p110 = scmp.ne.s32.totalorder %s98, %s99
      %p111 = scmp.eq.s32.totalorder %s26, 1
      %p112 = por %p110, %p111
      %p114 = scmp.ne.s32.totalorder %s99, %s113
      %p115 = scmp.eq.s32.totalorder %s26, 0
      %p116 = por %p114, %p115
      %s118 = sadd.s32 %s117, 1
      %p121 = scmp.eq.s32.totalorder %s20, 1
      %p122 = scmp.ne.s32.totalorder %s117, %s119
      %p123 = scmp.eq.s32.totalorder %s20, 0
      %p124 = por %p122, %p123
      %p125 = scmp.ne.s32.totalorder %s117, %s119
      %p126 = scmp.eq.s32.totalorder %s25, 1
      %p127 = por %p125, %p126
      %p128 = scmp.ne.s32.totalorder %s119, %s120
      %p129 = scmp.eq.s32.totalorder %s25, 0
      %p130 = por %p128, %p129
      %p131 = scmp.ne.s32.totalorder %s119, %s120
      %p132 = scmp.eq.s32.totalorder %s26, 1
      %p133 = por %p131, %p132
      %p135 = scmp.ne.s32.totalorder %s120, %s134
      %p136 = scmp.eq.s32.totalorder %s26, 0
      %p137 = por %p135, %p136
      %s139 = sadd.s32 %s138, 1
      %p142 = scmp.eq.s32.totalorder %s20, 1
      %p143 = scmp.ne.s32.totalorder %s138, %s140
      %p144 = scmp.eq.s32.totalorder %s20, 0
      %p145 = por %p143, %p144
      %p146 = scmp.ne.s32.totalorder %s138, %s140
      %p147 = scmp.eq.s32.totalorder %s25, 1
      %p148 = por %p146, %p147
      %p149 = scmp.ne.s32.totalorder %s140, %s141
      %p150 = scmp.eq.s32.totalorder %s25, 0
      %p151 = por %p149, %p150
      %p152 = scmp.ne.s32.totalorder %s140, %s141
      %p153 = scmp.eq.s32.totalorder %s26, 1
      %p154 = por %p152, %p153
      %p156 = scmp.ne.s32.totalorder %s141, %s155
      %p157 = scmp.eq.s32.totalorder %s26, 0
      %p158 = por %p156, %p157
      %s159 = ssub.s32 %s20, %s27
      %p160 = scmp.eq.s32.totalorder %s159, 0
      %s162 = sadd.s32 %s161, 1
      %s163 = scalar_select %p160, %s161, %s162
      %p166 = pneg %p160
      %p167 = scmp.eq.s32.totalorder %s20, 1
      %p168 = por %p166, %p167
      %p169 = scmp.ne.s32.totalorder %s161, %s164
      %p170 = scmp.eq.s32.totalorder %s20, 0
      %p171 = por %p169, %p170
      %p172 = scmp.ne.s32.totalorder %s161, %s164
      %p173 = scmp.eq.s32.totalorder %s25, 1
      %p174 = por %p172, %p173
      %p175 = scmp.ne.s32.totalorder %s164, %s165
      %p176 = scmp.eq.s32.totalorder %s25, 0
      %p177 = por %p175, %p176
      %p178 = scmp.ne.s32.totalorder %s164, %s165
      %p179 = scmp.eq.s32.totalorder %s26, 1
      %p180 = por %p178, %p179
      %p182 = scmp.ne.s32.totalorder %s165, %s181
      %p183 = scmp.eq.s32.totalorder %s26, 0
      %p184 = por %p182, %p183
      %p185 = scmp.le.s32.totalorder 1, %s20
      %p186 = scmp.lt.s32.totalorder %s20, 3
      %p187 = pnand %p185, %p186
      %p188 = pneg %p187
      // Predicated region
      $region9: #{tpu_custom_call.1} parent=5 // pred_check
        _
      $region10: #{tpu_custom_call.1} parent=5 // pred_check_branch
        %190 = sbr.rel (%p187) target = $region12
      $region11: #{tpu_custom_call.1} parent=5 // pred_region
        %s191 = ssub.s32 %s20, 1
        // Predicated region
        $region13: #{tpu_custom_call.1} parent=11 // pred_check
          %p192 = pneg %p67
        $region14: #{tpu_custom_call.1} parent=11 // pred_check_branch
          %194 = sbr.rel (%p192) target = $region16
        $region15: #{tpu_custom_call.1} parent=11 // pred_region
          %196 = vsyncadd [#allocation6], 0
          %s197 = sshll.u32 %s1, 4
          %s198 = int_to_ptr.hbm [resolvable:$true] %s197
          %s199 = sshll.u32 [#allocation5], 4
          %s200 = int_to_ptr.vmem [resolvable:$true] %s199
          %205 = dma.hbm_to_vmem [thread:$0]  %s198, 2048, %s200, [#allocation6], 128, 128, 8
        $region16: #{tpu_custom_call.1} parent=11 // pred_fallthru
          _
        // Predicated region
        $region17: #{tpu_custom_call.1} parent=11 // pred_check
          %p206 = pneg %p88
        $region18: #{tpu_custom_call.1} parent=11 // pred_check_branch
          %208 = sbr.rel (%p206) target = $region20
        $region19: #{tpu_custom_call.1} parent=11 // pred_region
          _
        $region20: #{tpu_custom_call.1} parent=11 // pred_fallthru
          _
        // Predicated region
        $region21: #{tpu_custom_call.1} parent=11 // pred_check
          %p209 = pneg %p109
        $region22: #{tpu_custom_call.1} parent=11 // pred_check_branch
          %211 = sbr.rel (%p209) target = $region24
        $region23: #{tpu_custom_call.1} parent=11 // pred_region
          %213 = vsyncadd [#allocation6], 0
          %s214 = sshll.u32 %s3, 4
          %s215 = int_to_ptr.hbm [resolvable:$true] %s214
          %s216 = sshll.u32 [#allocation7], 4
          %s217 = int_to_ptr.vmem [resolvable:$true] %s216
          %222 = dma.hbm_to_vmem [thread:$0]  %s215, 4096, %s217, [#allocation6], 256, 256, 16
        $region24: #{tpu_custom_call.1} parent=11 // pred_fallthru
          _
        // Predicated region
        $region25: #{tpu_custom_call.1} parent=11 // pred_check
          %p223 = pneg %p130
        $region26: #{tpu_custom_call.1} parent=11 // pred_check_branch
          %225 = sbr.rel (%p223) target = $region28
        $region27: #{tpu_custom_call.1} parent=11 // pred_region
          _
        $region28: #{tpu_custom_call.1} parent=11 // pred_fallthru
          _
        // Predicated region
        $region29: #{tpu_custom_call.1} parent=11 // pred_check
          %p226 = pneg %p151
        $region30: #{tpu_custom_call.1} parent=11 // pred_check_branch
          %228 = sbr.rel (%p226) target = $region32
        $region31: #{tpu_custom_call.1} parent=11 // pred_region
          %230 = vsyncadd [#allocation9], 0
          %s231 = sshll.u32 %s5, 4
          %s232 = int_to_ptr.hbm [resolvable:$true] %s231
          %s233 = sshll.u32 [#allocation8], 4
          %s234 = int_to_ptr.vmem [resolvable:$true] %s233
          %239 = dma.hbm_to_vmem [thread:$0]  %s232, 4096, %s234, [#allocation9], 256, 256, 16
        $region32: #{tpu_custom_call.1} parent=11 // pred_fallthru
          _
      $region12: #{tpu_custom_call.1} parent=5 // pred_fallthru
        _
      %p240 = scmp.lt.s32.totalorder %s20, 2
      // Predicated region
      $region33: #{tpu_custom_call.1} parent=5 // pred_check
        %p241 = pneg %p240
      $region34: #{tpu_custom_call.1} parent=5 // pred_check_branch
        %243 = sbr.rel (%p241) target = $region36
      $region35: #{tpu_custom_call.1} parent=5 // pred_region
        // Predicated region
        $region37: #{tpu_custom_call.1} parent=35 // pred_check
          %p244 = pneg %p40
        $region38: #{tpu_custom_call.1} parent=35 // pred_check_branch
          %246 = sbr.rel (%p244) target = $region40
        $region39: #{tpu_custom_call.1} parent=35 // pred_region
          %s247 = sand.u32 %s30, 1
          %s248 = scalar_lea.sflag [#allocation3], %s247
          %s249 = sand.u32 %s30, 1
          %s250 = smul.addr %s249, 64
          %s251 = scalar_lea.vmem [#allocation2], %s250
          %s252 = smul.u32 8, %s20
          %254 = vsyncadd %s248, 0
          %s255 = smul.addr %s252, 8
          %s256 = scalar_lea.hbm %s0, %s255
          %s257 = sshll.u32 %s256, 4
          %s258 = int_to_ptr.hbm [resolvable:$true] %s257
          %s259 = sshll.u32 %s251, 4
          %s260 = int_to_ptr.vmem [resolvable:$true] %s259
          %265 = dma.hbm_to_vmem [thread:$0]  %s258, 1024, %s260, %s248, 128, 128, 8
        $region40: #{tpu_custom_call.1} parent=35 // pred_fallthru
          _
      $region36: #{tpu_custom_call.1} parent=5 // pred_fallthru
        _
      %p266 = scmp.le.s32.totalorder 1, %s20
      %p267 = scmp.lt.s32.totalorder %s20, 3
      %p268 = pnand %p266, %p267
      %p269 = pneg %p268
      // Predicated region
      $region41: #{tpu_custom_call.1} parent=5 // pred_check
        _
      $region42: #{tpu_custom_call.1} parent=5 // pred_check_branch
        %271 = sbr.rel (%p268) target = $region44
      $region43: #{tpu_custom_call.1} parent=5 // pred_region
        %s272 = ssub.s32 %s20, 1
        %s273 = sand.u32 %s33, 1
        %s274 = scalar_lea.sflag [#allocation3], %s273
        %s275 = sand.u32 %s33, 1
        %s276 = smul.addr %s275, 64
        %s277 = scalar_lea.vmem [#allocation2], %s276
        // Predicated region
        $region45: #{tpu_custom_call.1} parent=43 // pred_check
          %p278 = pneg %p46
        $region46: #{tpu_custom_call.1} parent=43 // pred_check_branch
          %280 = sbr.rel (%p278) target = $region48
        $region47: #{tpu_custom_call.1} parent=43 // pred_region
          %282 = dma.done %s274, 1024
        $region48: #{tpu_custom_call.1} parent=43 // pred_fallthru
          _
        // Predicated region
        $region49: #{tpu_custom_call.1} parent=43 // pred_check
          %p283 = pneg %p67
        $region50: #{tpu_custom_call.1} parent=43 // pred_check_branch
          %285 = sbr.rel (%p283) target = $region52
        $region51: #{tpu_custom_call.1} parent=43 // pred_region
          %287 = dma.done [#allocation6], 2048
        $region52: #{tpu_custom_call.1} parent=43 // pred_fallthru
          _
        // Predicated region
        $region53: #{tpu_custom_call.1} parent=43 // pred_check
          %p288 = pneg %p109
        $region54: #{tpu_custom_call.1} parent=43 // pred_check_branch
          %290 = sbr.rel (%p288) target = $region56
        $region55: #{tpu_custom_call.1} parent=43 // pred_region
          %292 = dma.done [#allocation6], 4096
        $region56: #{tpu_custom_call.1} parent=43 // pred_fallthru
          _
        // Predicated region
        $region57: #{tpu_custom_call.1} parent=43 // pred_check
          %p293 = pneg %p151
        $region58: #{tpu_custom_call.1} parent=43 // pred_check_branch
          %295 = sbr.rel (%p293) target = $region60
        $region59: #{tpu_custom_call.1} parent=43 // pred_region
          %297 = dma.done [#allocation9], 4096
        $region60: #{tpu_custom_call.1} parent=43 // pred_fallthru
          _
        %s298 = sand.u32 %s33, 1
        %s299 = scalar_lea.sflag [#allocation3], %s298
        %s300 = sand.u32 %s33, 1
        %s301 = smul.addr %s300, 64
        %s302 = scalar_lea.vmem [#allocation2], %s301
        %p303 = pneg %p46
        %p304 = pneg %p43
        %p305 = pneg %p67
        %p306 = pneg %p64
        %p307 = pneg %p88
        %p308 = pneg %p85
        %p309 = pneg %p109
        %p310 = pneg %p106
        %p311 = pneg %p130
        %p312 = pneg %p127
        %p313 = pneg %p151
        %p314 = pneg %p148
        %p315 = pneg %p177
        %p316 = pneg %p174
        %s317 = sand.u32 %s164, 1
        %s318 = scalar_lea.sflag [#allocation4], %s317
        %s319 = sand.u32 %s164, 1
        %s320 = smul.addr %s319, 128
        %s321 = scalar_lea.vmem [#allocation10], %s320
        %s322 = smul.u32 8, %s25
        %s323 = smul.u32 8, %s25
        %v324 = vld [vmem:[%s277] sm:$0xff]
        %v325 = vld [vmem:[%s277 + $0x8] sm:$0xff]
        %v326 = vld [vmem:[%s277 + $0x10] sm:$0xff]
        %v327 = vld [vmem:[%s277 + $0x18] sm:$0xff]
        %v328 = vld [vmem:[%s277 + $0x20] sm:$0xff]
        %v329 = vld [vmem:[%s277 + $0x28] sm:$0xff]
        %v330 = vld [vmem:[%s277 + $0x30] sm:$0xff]
        %v331 = vld [vmem:[%s277 + $0x38] sm:$0xff]
        %vm332 = vcmp.gt.f32.partialorder %v324, 0.0
        %vm333 = vcmp.gt.f32.partialorder %v325, 0.0
        %vm334 = vcmp.gt.f32.partialorder %v326, 0.0
        %vm335 = vcmp.gt.f32.partialorder %v327, 0.0
        %vm336 = vcmp.gt.f32.partialorder %v328, 0.0
        %vm337 = vcmp.gt.f32.partialorder %v329, 0.0
        %vm338 = vcmp.gt.f32.partialorder %v330, 0.0
        %vm339 = vcmp.gt.f32.partialorder %v331, 0.0
        %v340 = vmul.f32 %v324, 0.2
        %v341 = vmul.f32 %v325, 0.2
        %v342 = vmul.f32 %v326, 0.2
        %v343 = vmul.f32 %v327, 0.2
        %v344 = vmul.f32 %v328, 0.2
        %v345 = vmul.f32 %v329, 0.2
        %v346 = vmul.f32 %v330, 0.2
        %v347 = vmul.f32 %v331, 0.2
        %v348 = vsel %vm332, %v324, %v340
        %v349 = vsel %vm333, %v325, %v341
        %v350 = vsel %vm334, %v326, %v342
        %v351 = vsel %vm335, %v327, %v343
        %v352 = vsel %vm336, %v328, %v344
        %v353 = vsel %vm337, %v329, %v345
        %v354 = vsel %vm338, %v330, %v346
        %v355 = vsel %vm339, %v331, %v347
        %v356 = vld [vmem:[#allocation5] sm:$0xff]
        %v357 = vld [vmem:[#allocation5 + $0x8] sm:$0xff]
        %v358 = vld [vmem:[#allocation5 + $0x10] sm:$0xff]
        %v359 = vld [vmem:[#allocation5 + $0x18] sm:$0xff]
        %v360 = vld [vmem:[#allocation5 + $0x20] sm:$0xff]
        %v361 = vld [vmem:[#allocation5 + $0x28] sm:$0xff]
        %v362 = vld [vmem:[#allocation5 + $0x30] sm:$0xff]
        %v363 = vld [vmem:[#allocation5 + $0x38] sm:$0xff]
        %v364 = vld [vmem:[#allocation5 + $0x40] sm:$0xff]
        %v365 = vld [vmem:[#allocation5 + $0x48] sm:$0xff]
        %v366 = vld [vmem:[#allocation5 + $0x50] sm:$0xff]
        %v367 = vld [vmem:[#allocation5 + $0x58] sm:$0xff]
        %v368 = vld [vmem:[#allocation5 + $0x60] sm:$0xff]
        %v369 = vld [vmem:[#allocation5 + $0x68] sm:$0xff]
        %v370 = vld [vmem:[#allocation5 + $0x70] sm:$0xff]
        %v371 = vld [vmem:[#allocation5 + $0x78] sm:$0xff]
        %v372 = vld [vmem:[%s2] sm:$0x1]
        %v374 = vperm.slane %v372, 0
        %376 = vmatpush.msra.mxu0 %v371
        %377 = vmatpush.msra.mxu0 %v370
        %378 = vmatpush.msra.mxu0 %v369
        %379 = vmatpush.msra.mxu0 %v368
        %380 = vmatpush.msra.mxu0 %v367
        %381 = vmatpush.msra.mxu0 %v366
        %382 = vmatpush.msra.mxu0 %v365
        %383 = vmatpush.msra.mxu0 %v364
        %384 = vmatpush.msra.mxu0 %v363
        %385 = vmatpush.msra.mxu0 %v362
        %386 = vmatpush.msra.mxu0 %v361
        %387 = vmatpush.msra.mxu0 %v360
        %388 = vmatpush.msra.mxu0 %v359
        %389 = vmatpush.msra.mxu0 %v358
        %390 = vmatpush.msra.mxu0 %v357
        %391 = vmatpush.msra.mxu0 %v356
        %392 = vmatmul.f32.gmra.mxu0 %v348
        %v393 = vpop.f32.mrf.mxu0
        %v394 = vadd.f32 %v374, %v393
        %395 = vmatmul.f32.gmra.mxu0 %v349
        %v396 = vpop.f32.mrf.mxu0
        %v397 = vadd.f32 %v374, %v396
        %398 = vmatmul.f32.gmra.mxu0 %v350
        %v399 = vpop.f32.mrf.mxu0
        %v400 = vadd.f32 %v374, %v399
        %401 = vmatmul.f32.gmra.mxu0 %v351
        %v402 = vpop.f32.mrf.mxu0
        %v403 = vadd.f32 %v374, %v402
        %404 = vmatmul.f32.gmra.mxu0 %v352
        %v405 = vpop.f32.mrf.mxu0
        %v406 = vadd.f32 %v374, %v405
        %407 = vmatmul.f32.gmra.mxu0 %v353
        %v408 = vpop.f32.mrf.mxu0
        %v409 = vadd.f32 %v374, %v408
        %410 = vmatmul.f32.gmra.mxu0 %v354
        %v411 = vpop.f32.mrf.mxu0
        %v412 = vadd.f32 %v374, %v411
        %413 = vmatmul.f32.gmra.mxu0 %v355
        %v414 = vpop.f32.mrf.mxu0
        %v415 = vadd.f32 %v374, %v414
        %416 = vdwg.mxu0
        %vm417 = vcmp.gt.f32.partialorder %v394, 0.0
        %vm418 = vcmp.gt.f32.partialorder %v397, 0.0
        %vm419 = vcmp.gt.f32.partialorder %v400, 0.0
        %vm420 = vcmp.gt.f32.partialorder %v403, 0.0
        %vm421 = vcmp.gt.f32.partialorder %v406, 0.0
        %vm422 = vcmp.gt.f32.partialorder %v409, 0.0
        %vm423 = vcmp.gt.f32.partialorder %v412, 0.0
        %vm424 = vcmp.gt.f32.partialorder %v415, 0.0
        %v425 = vmul.f32 %v394, 0.2
        %v426 = vmul.f32 %v397, 0.2
        %v427 = vmul.f32 %v400, 0.2
        %v428 = vmul.f32 %v403, 0.2
        %v429 = vmul.f32 %v406, 0.2
        %v430 = vmul.f32 %v409, 0.2
        %v431 = vmul.f32 %v412, 0.2
        %v432 = vmul.f32 %v415, 0.2
        %v433 = vsel %vm417, %v394, %v425
        %v434 = vsel %vm418, %v397, %v426
        %v435 = vsel %vm419, %v400, %v427
        %v436 = vsel %vm420, %v403, %v428
        %v437 = vsel %vm421, %v406, %v429
        %v438 = vsel %vm422, %v409, %v430
        %v439 = vsel %vm423, %v412, %v431
        %v440 = vsel %vm424, %v415, %v432
        %v441 = vld [vmem:[#allocation7] sm:$0xff]
        %v442 = vld [vmem:[#allocation7 + $0x8] sm:$0xff]
        %v443 = vld [vmem:[#allocation7 + $0x10] sm:$0xff]
        %v444 = vld [vmem:[#allocation7 + $0x18] sm:$0xff]
        %v445 = vld [vmem:[#allocation7 + $0x20] sm:$0xff]
        %v446 = vld [vmem:[#allocation7 + $0x28] sm:$0xff]
        %v447 = vld [vmem:[#allocation7 + $0x30] sm:$0xff]
        %v448 = vld [vmem:[#allocation7 + $0x38] sm:$0xff]
        %v449 = vld [vmem:[#allocation7 + $0x40] sm:$0xff]
        %v450 = vld [vmem:[#allocation7 + $0x48] sm:$0xff]
        %v451 = vld [vmem:[#allocation7 + $0x50] sm:$0xff]
        %v452 = vld [vmem:[#allocation7 + $0x58] sm:$0xff]
        %v453 = vld [vmem:[#allocation7 + $0x60] sm:$0xff]
        %v454 = vld [vmem:[#allocation7 + $0x68] sm:$0xff]
        %v455 = vld [vmem:[#allocation7 + $0x70] sm:$0xff]
        %v456 = vld [vmem:[#allocation7 + $0x78] sm:$0xff]
        %v457 = vld [vmem:[#allocation7 + $0x80] sm:$0xff]
        %v458 = vld [vmem:[#allocation7 + $0x88] sm:$0xff]
        %v459 = vld [vmem:[#allocation7 + $0x90] sm:$0xff]
        %v460 = vld [vmem:[#allocation7 + $0x98] sm:$0xff]
        %v461 = vld [vmem:[#allocation7 + $0xa0] sm:$0xff]
        %v462 = vld [vmem:[#allocation7 + $0xa8] sm:$0xff]
        %v463 = vld [vmem:[#allocation7 + $0xb0] sm:$0xff]
        %v464 = vld [vmem:[#allocation7 + $0xb8] sm:$0xff]
        %v465 = vld [vmem:[#allocation7 + $0xc0] sm:$0xff]
        %v466 = vld [vmem:[#allocation7 + $0xc8] sm:$0xff]
        %v467 = vld [vmem:[#allocation7 + $0xd0] sm:$0xff]
        %v468 = vld [vmem:[#allocation7 + $0xd8] sm:$0xff]
        %v469 = vld [vmem:[#allocation7 + $0xe0] sm:$0xff]
        %v470 = vld [vmem:[#allocation7 + $0xe8] sm:$0xff]
        %v471 = vld [vmem:[#allocation7 + $0xf0] sm:$0xff]
        %v472 = vld [vmem:[#allocation7 + $0xf8] sm:$0xff]
        %v473 = vld [vmem:[%s4] sm:$0x3]
        %v475 = vperm.slane %v473, 0
        %v476 = vperm.slane %v473, 1
        %479 = vmatpush.msra.mxu0 %v471
        %480 = vmatpush.msra.mxu0 %v469
        %481 = vmatpush.msra.mxu0 %v467
        %482 = vmatpush.msra.mxu0 %v465
        %483 = vmatpush.msra.mxu0 %v463
        %484 = vmatpush.msra.mxu0 %v461
        %485 = vmatpush.msra.mxu0 %v459
        %486 = vmatpush.msra.mxu0 %v457
        %487 = vmatpush.msra.mxu0 %v455
        %488 = vmatpush.msra.mxu0 %v453
        %489 = vmatpush.msra.mxu0 %v451
        %490 = vmatpush.msra.mxu0 %v449
        %491 = vmatpush.msra.mxu0 %v447
        %492 = vmatpush.msra.mxu0 %v445
        %493 = vmatpush.msra.mxu0 %v443
        %494 = vmatpush.msra.mxu0 %v441
        %495 = vmatmul.f32.gmra.mxu0 %v433
        %v496 = vpop.f32.mrf.mxu0
        %v497 = vadd.f32 %v475, %v496
        %498 = vmatmul.f32.gmra.mxu0 %v434
        %v499 = vpop.f32.mrf.mxu0
        %v500 = vadd.f32 %v475, %v499
        %501 = vmatmul.f32.gmra.mxu0 %v435
        %v502 = vpop.f32.mrf.mxu0
        %v503 = vadd.f32 %v475, %v502
        %504 = vmatmul.f32.gmra.mxu0 %v436
        %v505 = vpop.f32.mrf.mxu0
        %v506 = vadd.f32 %v475, %v505
        %507 = vmatmul.f32.gmra.mxu0 %v437
        %v508 = vpop.f32.mrf.mxu0
        %v509 = vadd.f32 %v475, %v508
        %510 = vmatmul.f32.gmra.mxu0 %v438
        %v511 = vpop.f32.mrf.mxu0
        %v512 = vadd.f32 %v475, %v511
        %513 = vmatmul.f32.gmra.mxu0 %v439
        %v514 = vpop.f32.mrf.mxu0
        %v515 = vadd.f32 %v475, %v514
        %516 = vmatmul.f32.gmra.mxu0 %v440
        %v517 = vpop.f32.mrf.mxu0
        %v518 = vadd.f32 %v475, %v517
        %519 = vdwg.mxu0
        %520 = vmatpush.msra.mxu0 %v472
        %521 = vmatpush.msra.mxu0 %v470
        %522 = vmatpush.msra.mxu0 %v468
        %523 = vmatpush.msra.mxu0 %v466
        %524 = vmatpush.msra.mxu0 %v464
        %525 = vmatpush.msra.mxu0 %v462
        %526 = vmatpush.msra.mxu0 %v460
        %527 = vmatpush.msra.mxu0 %v458
        %528 = vmatpush.msra.mxu0 %v456
        %529 = vmatpush.msra.mxu0 %v454
        %530 = vmatpush.msra.mxu0 %v452
        %531 = vmatpush.msra.mxu0 %v450
        %532 = vmatpush.msra.mxu0 %v448
        %533 = vmatpush.msra.mxu0 %v446
        %534 = vmatpush.msra.mxu0 %v444
        %535 = vmatpush.msra.mxu0 %v442
        %536 = vmatmul.f32.gmra.mxu0 %v433
        %v537 = vpop.f32.mrf.mxu0
        %v538 = vadd.f32 %v476, %v537
        %539 = vmatmul.f32.gmra.mxu0 %v434
        %v540 = vpop.f32.mrf.mxu0
        %v541 = vadd.f32 %v476, %v540
        %542 = vmatmul.f32.gmra.mxu0 %v435
        %v543 = vpop.f32.mrf.mxu0
        %v544 = vadd.f32 %v476, %v543
        %545 = vmatmul.f32.gmra.mxu0 %v436
        %v546 = vpop.f32.mrf.mxu0
        %v547 = vadd.f32 %v476, %v546
        %548 = vmatmul.f32.gmra.mxu0 %v437
        %v549 = vpop.f32.mrf.mxu0
        %v550 = vadd.f32 %v476, %v549
        %551 = vmatmul.f32.gmra.mxu0 %v438
        %v552 = vpop.f32.mrf.mxu0
        %v553 = vadd.f32 %v476, %v552
        %554 = vmatmul.f32.gmra.mxu0 %v439
        %v555 = vpop.f32.mrf.mxu0
        %v556 = vadd.f32 %v476, %v555
        %557 = vmatmul.f32.gmra.mxu0 %v440
        %v558 = vpop.f32.mrf.mxu0
        %v559 = vadd.f32 %v476, %v558
        %560 = vdwg.mxu0
        %v561 = vld [vmem:[#allocation8] sm:$0xff]
        %v562 = vld [vmem:[#allocation8 + $0x8] sm:$0xff]
        %v563 = vld [vmem:[#allocation8 + $0x10] sm:$0xff]
        %v564 = vld [vmem:[#allocation8 + $0x18] sm:$0xff]
        %v565 = vld [vmem:[#allocation8 + $0x20] sm:$0xff]
        %v566 = vld [vmem:[#allocation8 + $0x28] sm:$0xff]
        %v567 = vld [vmem:[#allocation8 + $0x30] sm:$0xff]
        %v568 = vld [vmem:[#allocation8 + $0x38] sm:$0xff]
        %v569 = vld [vmem:[#allocation8 + $0x40] sm:$0xff]
        %v570 = vld [vmem:[#allocation8 + $0x48] sm:$0xff]
        %v571 = vld [vmem:[#allocation8 + $0x50] sm:$0xff]
        %v572 = vld [vmem:[#allocation8 + $0x58] sm:$0xff]
        %v573 = vld [vmem:[#allocation8 + $0x60] sm:$0xff]
        %v574 = vld [vmem:[#allocation8 + $0x68] sm:$0xff]
        %v575 = vld [vmem:[#allocation8 + $0x70] sm:$0xff]
        %v576 = vld [vmem:[#allocation8 + $0x78] sm:$0xff]
        %v577 = vld [vmem:[#allocation8 + $0x80] sm:$0xff]
        %v578 = vld [vmem:[#allocation8 + $0x88] sm:$0xff]
        %v579 = vld [vmem:[#allocation8 + $0x90] sm:$0xff]
        %v580 = vld [vmem:[#allocation8 + $0x98] sm:$0xff]
        %v581 = vld [vmem:[#allocation8 + $0xa0] sm:$0xff]
        %v582 = vld [vmem:[#allocation8 + $0xa8] sm:$0xff]
        %v583 = vld [vmem:[#allocation8 + $0xb0] sm:$0xff]
        %v584 = vld [vmem:[#allocation8 + $0xb8] sm:$0xff]
        %v585 = vld [vmem:[#allocation8 + $0xc0] sm:$0xff]
        %v586 = vld [vmem:[#allocation8 + $0xc8] sm:$0xff]
        %v587 = vld [vmem:[#allocation8 + $0xd0] sm:$0xff]
        %v588 = vld [vmem:[#allocation8 + $0xd8] sm:$0xff]
        %v589 = vld [vmem:[#allocation8 + $0xe0] sm:$0xff]
        %v590 = vld [vmem:[#allocation8 + $0xe8] sm:$0xff]
        %v591 = vld [vmem:[#allocation8 + $0xf0] sm:$0xff]
        %v592 = vld [vmem:[#allocation8 + $0xf8] sm:$0xff]
        %593 = vmatpush.msra.mxu0 %v591
        %594 = vmatpush.msra.mxu0 %v589
        %595 = vmatpush.msra.mxu0 %v587
        %596 = vmatpush.msra.mxu0 %v585
        %597 = vmatpush.msra.mxu0 %v583
        %598 = vmatpush.msra.mxu0 %v581
        %599 = vmatpush.msra.mxu0 %v579
        %600 = vmatpush.msra.mxu0 %v577
        %601 = vmatpush.msra.mxu0 %v575
        %602 = vmatpush.msra.mxu0 %v573
        %603 = vmatpush.msra.mxu0 %v571
        %604 = vmatpush.msra.mxu0 %v569
        %605 = vmatpush.msra.mxu0 %v567
        %606 = vmatpush.msra.mxu0 %v565
        %607 = vmatpush.msra.mxu0 %v563
        %608 = vmatpush.msra.mxu0 %v561
        %609 = vmatmul.f32.gmra.mxu0 %v324
        %v610 = vpop.f32.mrf.mxu0
        %v611 = vadd.f32 %v497, %v610
        %612 = vmatmul.f32.gmra.mxu0 %v325
        %v613 = vpop.f32.mrf.mxu0
        %v614 = vadd.f32 %v500, %v613
        %615 = vmatmul.f32.gmra.mxu0 %v326
        %v616 = vpop.f32.mrf.mxu0
        %v617 = vadd.f32 %v503, %v616
        %618 = vmatmul.f32.gmra.mxu0 %v327
        %v619 = vpop.f32.mrf.mxu0
        %v620 = vadd.f32 %v506, %v619
        %621 = vmatmul.f32.gmra.mxu0 %v328
        %v622 = vpop.f32.mrf.mxu0
        %v623 = vadd.f32 %v509, %v622
        %624 = vmatmul.f32.gmra.mxu0 %v329
        %v625 = vpop.f32.mrf.mxu0
        %v626 = vadd.f32 %v512, %v625
        %627 = vmatmul.f32.gmra.mxu0 %v330
        %v628 = vpop.f32.mrf.mxu0
        %v629 = vadd.f32 %v515, %v628
        %630 = vmatmul.f32.gmra.mxu0 %v331
        %v631 = vpop.f32.mrf.mxu0
        %v632 = vadd.f32 %v518, %v631
        %633 = vdwg.mxu0
        %634 = vmatpush.msra.mxu0 %v592
        %635 = vmatpush.msra.mxu0 %v590
        %636 = vmatpush.msra.mxu0 %v588
        %637 = vmatpush.msra.mxu0 %v586
        %638 = vmatpush.msra.mxu0 %v584
        %639 = vmatpush.msra.mxu0 %v582
        %640 = vmatpush.msra.mxu0 %v580
        %641 = vmatpush.msra.mxu0 %v578
        %642 = vmatpush.msra.mxu0 %v576
        %643 = vmatpush.msra.mxu0 %v574
        %644 = vmatpush.msra.mxu0 %v572
        %645 = vmatpush.msra.mxu0 %v570
        %646 = vmatpush.msra.mxu0 %v568
        %647 = vmatpush.msra.mxu0 %v566
        %648 = vmatpush.msra.mxu0 %v564
        %649 = vmatpush.msra.mxu0 %v562
        %650 = vmatmul.f32.gmra.mxu0 %v324
        %v651 = vpop.f32.mrf.mxu0
        %v652 = vadd.f32 %v538, %v651
        %653 = vmatmul.f32.gmra.mxu0 %v325
        %v654 = vpop.f32.mrf.mxu0
        %v655 = vadd.f32 %v541, %v654
        %656 = vmatmul.f32.gmra.mxu0 %v326
        %v657 = vpop.f32.mrf.mxu0
        %v658 = vadd.f32 %v544, %v657
        %659 = vmatmul.f32.gmra.mxu0 %v327
        %v660 = vpop.f32.mrf.mxu0
        %v661 = vadd.f32 %v547, %v660
        %662 = vmatmul.f32.gmra.mxu0 %v328
        %v663 = vpop.f32.mrf.mxu0
        %v664 = vadd.f32 %v550, %v663
        %665 = vmatmul.f32.gmra.mxu0 %v329
        %v666 = vpop.f32.mrf.mxu0
        %v667 = vadd.f32 %v553, %v666
        %668 = vmatmul.f32.gmra.mxu0 %v330
        %v669 = vpop.f32.mrf.mxu0
        %v670 = vadd.f32 %v556, %v669
        %671 = vmatmul.f32.gmra.mxu0 %v331
        %v672 = vpop.f32.mrf.mxu0
        %v673 = vadd.f32 %v559, %v672
        %674 = vdwg.mxu0
        %v675 = vmul.f32 %v611, 0.70710677
        %v676 = vmul.f32 %v652, 0.70710677
        %v677 = vmul.f32 %v614, 0.70710677
        %v678 = vmul.f32 %v655, 0.70710677
        %v679 = vmul.f32 %v617, 0.70710677
        %v680 = vmul.f32 %v658, 0.70710677
        %v681 = vmul.f32 %v620, 0.70710677
        %v682 = vmul.f32 %v661, 0.70710677
        %v683 = vmul.f32 %v623, 0.70710677
        %v684 = vmul.f32 %v664, 0.70710677
        %v685 = vmul.f32 %v626, 0.70710677
        %v686 = vmul.f32 %v667, 0.70710677
        %v687 = vmul.f32 %v629, 0.70710677
        %v688 = vmul.f32 %v670, 0.70710677
        %v689 = vmul.f32 %v632, 0.70710677
        %v690 = vmul.f32 %v673, 0.70710677
        %691 = vst [vmem:[%s321] sm:$0xff] %v675
        %692 = vst [vmem:[%s321 + $0x8] sm:$0xff] %v676
        %693 = vst [vmem:[%s321 + $0x10] sm:$0xff] %v677
        %694 = vst [vmem:[%s321 + $0x18] sm:$0xff] %v678
        %695 = vst [vmem:[%s321 + $0x20] sm:$0xff] %v679
        %696 = vst [vmem:[%s321 + $0x28] sm:$0xff] %v680
        %697 = vst [vmem:[%s321 + $0x30] sm:$0xff] %v681
        %698 = vst [vmem:[%s321 + $0x38] sm:$0xff] %v682
        %699 = vst [vmem:[%s321 + $0x40] sm:$0xff] %v683
        %700 = vst [vmem:[%s321 + $0x48] sm:$0xff] %v684
        %701 = vst [vmem:[%s321 + $0x50] sm:$0xff] %v685
        %702 = vst [vmem:[%s321 + $0x58] sm:$0xff] %v686
        %703 = vst [vmem:[%s321 + $0x60] sm:$0xff] %v687
        %704 = vst [vmem:[%s321 + $0x68] sm:$0xff] %v688
        %705 = vst [vmem:[%s321 + $0x70] sm:$0xff] %v689
        %706 = vst [vmem:[%s321 + $0x78] sm:$0xff] %v690
        %s707 = sand.u32 %s164, 1
        %s708 = scalar_lea.sflag [#allocation4], %s707
        %s709 = sand.u32 %s164, 1
        %s710 = smul.addr %s709, 128
        %s711 = scalar_lea.vmem [#allocation10], %s710
        // Predicated region
        $region61: #{tpu_custom_call.1} parent=43 // pred_check
          %p712 = pneg %p174
        $region62: #{tpu_custom_call.1} parent=43 // pred_check_branch
          %714 = sbr.rel (%p712) target = $region64
        $region63: #{tpu_custom_call.1} parent=43 // pred_region
          %s715 = smul.u32 8, %s25
          %717 = vsyncadd %s708, 0
          %s718 = smul.addr %s715, 2
          %s719 = smul.addr %s718, 8
          %s720 = scalar_lea.hbm %s6, %s719
          %s721 = sshll.u32 %s711, 4
          %s722 = int_to_ptr.vmem [resolvable:$true] %s721
          %s723 = sshll.u32 %s720, 4
          %s724 = int_to_ptr.hbm [resolvable:$true] %s723
          %729 = dma.vmem_to_hbm [thread:$0]  %s722, 2048, %s724, %s708, 256, 256, 16
        $region64: #{tpu_custom_call.1} parent=43 // pred_fallthru
          _
      $region44: #{tpu_custom_call.1} parent=5 // pred_fallthru
        _
      %p730 = scmp.le.s32.totalorder 2, %s20
      // Predicated region
      $region65: #{tpu_custom_call.1} parent=5 // pred_check
        %p731 = pneg %p730
      $region66: #{tpu_custom_call.1} parent=5 // pred_check_branch
        %733 = sbr.rel (%p731) target = $region68
      $region67: #{tpu_custom_call.1} parent=5 // pred_region
        %s734 = ssub.s32 %s20, 2
        // Predicated region
        $region69: #{tpu_custom_call.1} parent=67 // pred_check
          %p735 = pneg %p180
        $region70: #{tpu_custom_call.1} parent=67 // pred_check_branch
          %737 = sbr.rel (%p735) target = $region72
        $region71: #{tpu_custom_call.1} parent=67 // pred_region
          %s738 = sand.u32 %s165, 1
          %s739 = scalar_lea.sflag [#allocation4], %s738
          %s740 = sand.u32 %s165, 1
          %s741 = smul.addr %s740, 128
          %s742 = scalar_lea.vmem [#allocation10], %s741
          %744 = dma.done %s739, 2048
        $region72: #{tpu_custom_call.1} parent=67 // pred_fallthru
          _
      $region68: #{tpu_custom_call.1} parent=5 // pred_fallthru
        _
    $region6: #{tpu_custom_call.1} parent=1 // loop_footer
      %s24 = sadd.s32 1, %s20
    $region7: #{tpu_custom_call.1} parent=1 // loop_footer_branch
      %19 = sbr.rel target = $region3
    $region8: #{tpu_custom_call.1} parent=1 // loop_exit
      _
    %745 = vsyncpa [#allocation3], 1
    %s746 = scalar_lea.sflag [#allocation3], 1
    %747 = vsyncpa %s746, 1
    %748 = vsyncpa [#allocation6], 1
    %749 = vsyncpa [#allocation9], 1
    %750 = vsyncpa [#allocation4], 1
    %s751 = scalar_lea.sflag [#allocation4], 1
    %752 = vsyncpa %s751, 1

</llo_original>
